<compile_context>
chip_gen: v5e
topology: v5e:2x2
jax: 0.10.0
libtpu: 0.0.40
codegen_flags: <defaults>
</compile_context>

<pallas_src>
import jax
import jax.numpy as jnp
from jax.experimental import pallas as pl
from jax.experimental.pallas import tpu as pltpu


def _cat_kernel(a_ref, b_ref, out_ref):
    la = a_ref.shape[1]
    out_ref[:, :la, :] = a_ref[...]
    out_ref[:, la:, :] = b_ref[...]


def _round_up(x, m):
    return ((x + m - 1) // m) * m


def cat_forward(a3, b3, *, vmem_budget_bytes=24 << 20, vmem_limit_bytes=48 << 20):
    """Pallas equivalent of torch.cat((a3, b3), dim=1) for 3-D inputs.

    a3: (B, La, C), b3: (B, Lb, C) -> (B, La + Lb, C)
    """
    assert a3.ndim == 3 and b3.ndim == 3, "expected (B, L, C) inputs"
    B, La, C = a3.shape
    Bb, Lb, Cb = b3.shape
    assert B == Bb and C == Cb and a3.dtype == b3.dtype
    Lo = La + Lb

    itemsize = jnp.dtype(a3.dtype).itemsize
    sublane = 8 * max(1, 4 // itemsize)   # 8 (f32) / 16 (bf16) / 32 (int8)

    def row_bytes(c_tile):
        # (sublane, 128)-padded VMEM bytes per batch row for a + b + out blocks.
        lanes = _round_up(c_tile, 128)
        rows = (_round_up(La, sublane) + _round_up(Lb, sublane)
                + _round_up(Lo, sublane))
        return rows * lanes * itemsize

    # Channel tile: full C by default; only split C when a single batch row
    # would blow the budget AND C splits cleanly into multiples of 128, so
    # every block still satisfies the (8, 128) rule exactly.
    TC = C
    if 2 * row_bytes(C) > vmem_budget_bytes and C % 128 == 0:
        TC = 128
        while (TC * 2 <= C and C % (TC * 2) == 0
               and 2 * row_bytes(TC * 2) <= vmem_budget_bytes):
            TC *= 2
    # TODO(synk): shapes with huge (La+Lb) and C not a multiple of 128 fall
    # back to TB=1 with full C; tile L as well if that ever exceeds VMEM.

    # Batch tile from the byte budget (x2 for double-buffering); cap so the
    # grid has at least two steps, letting v7x's two TensorCores split it.
    TB = max(1, vmem_budget_bytes // (2 * row_bytes(TC)))
    if B >= 2:
        TB = min(TB, pl.cdiv(B, 2))
    TB = min(TB, B)

    grid = (pl.cdiv(B, TB), C // TC)
    bytes_accessed = 2 * (a3.size + b3.size) * itemsize   # read a, b + write out

    return pl.pallas_call(
        _cat_kernel,
        out_shape=jax.ShapeDtypeStruct((B, Lo, C), a3.dtype),
        grid=grid,
        in_specs=[
            pl.BlockSpec((TB, La, TC), lambda i, j: (i, 0, j)),
            pl.BlockSpec((TB, Lb, TC), lambda i, j: (i, 0, j)),
        ],
        out_specs=pl.BlockSpec((TB, Lo, TC), lambda i, j: (i, 0, j)),
        compiler_params=pltpu.CompilerParams(
            dimension_semantics=("parallel", "parallel"),
            vmem_limit_bytes=vmem_limit_bytes),
        cost_estimate=pl.CostEstimate(
            flops=0, transcendentals=0, bytes_accessed=bytes_accessed),
    )(a3, b3)


if __name__ == "__main__":
    key = jax.random.PRNGKey(0)
    ka, kb = jax.random.split(key)

    # Small shapes consistent with the module's usage (CDR3 one-hot features).
    B, L, C = 2, 16, 20
    a3 = jax.random.normal(ka, (B, L, C), jnp.float32)
    b3 = jax.random.normal(kb, (B, L, C), jnp.float32)

    out = jax.block_until_ready(cat_forward(a3, b3))
    ref = jnp.concatenate([a3, b3], axis=1)
    assert out.shape == (B, 2 * L, C)
    assert jnp.array_equal(out, ref)

    # Prime batch + unequal sequence lengths: exercises the cdiv grid with a
    # ragged last batch block and the sublane-offset second store (Lb=7).
    ka2, kb2 = jax.random.split(jax.random.PRNGKey(1))
    B2, La2, Lb2 = 37, 16, 7
    a2 = jax.random.normal(ka2, (B2, La2, C), jnp.float32)
    b2 = jax.random.normal(kb2, (B2, Lb2, C), jnp.float32)
    out2 = jax.block_until_ready(cat_forward(a2, b2))
    assert out2.shape == (B2, La2 + Lb2, C)
    assert jnp.array_equal(out2, jnp.concatenate([a2, b2], axis=1))

    print("KERNEL_OK")
</pallas_src>

<mosaic_0001>
module attributes {stable_mosaic.version = 11 : i64} {
  func.func @_cat_kernel(%arg0: i32, %arg1: i32, %arg2: memref<1x16x20xf32, #tpu.memory_space<vmem>>, %arg3: memref<1x16x20xf32, #tpu.memory_space<vmem>>, %arg4: memref<1x32x20xf32, #tpu.memory_space<vmem>>) attributes {dimension_semantics = [#tpu.dimension_semantics<parallel>, #tpu.dimension_semantics<parallel>], iteration_bounds = array<i64: 2, 1>, scalar_prefetch = 0 : i64, scratch_operands = 0 : i64, tpu.core_type = #tpu.core_type<tc>, window_params = [{transform_indices = @transform_0, window_bounds = array<i64: 1, 16, 20>}, {transform_indices = @transform_1, window_bounds = array<i64: 1, 16, 20>}, {transform_indices = @transform_2, window_bounds = array<i64: 1, 32, 20>}]} {
    %c0 = arith.constant 0 : index
    %c0_0 = arith.constant 0 : index
    %c0_1 = arith.constant 0 : index
    %0 = vector.load %arg2[%c0, %c0_0, %c0_1] : memref<1x16x20xf32, #tpu.memory_space<vmem>>, vector<1x16x20xf32>
    %c0_2 = arith.constant 0 : index
    %c0_3 = arith.constant 0 : index
    %c0_4 = arith.constant 0 : index
    %1 = vector.load %arg4[%c0_2, %c0_3, %c0_4] : memref<1x32x20xf32, #tpu.memory_space<vmem>>, vector<1x16x20xf32>
    tpu.vector_store %arg4[%c0_2, %c0_3, %c0_4], %0 {strides = array<i32>} : memref<1x32x20xf32, #tpu.memory_space<vmem>>, vector<1x16x20xf32>,
    %c0_5 = arith.constant 0 : index
    %c0_6 = arith.constant 0 : index
    %c0_7 = arith.constant 0 : index
    %2 = vector.load %arg3[%c0_5, %c0_6, %c0_7] : memref<1x16x20xf32, #tpu.memory_space<vmem>>, vector<1x16x20xf32>
    %c0_8 = arith.constant 0 : index
    %c16 = arith.constant 16 : index
    %c0_9 = arith.constant 0 : index
    %3 = vector.load %arg4[%c0_8, %c16, %c0_9] : memref<1x32x20xf32, #tpu.memory_space<vmem>>, vector<1x16x20xf32>
    tpu.vector_store %arg4[%c0_8, %c16, %c0_9], %2 {strides = array<i32>} : memref<1x32x20xf32, #tpu.memory_space<vmem>>, vector<1x16x20xf32>,
    return
  }
  func.func @transform_0(%arg0: i32, %arg1: i32) -> (i32, i32, i32) {
    %c0_i32 = arith.constant 0 : i32
    %c0_i32_0 = arith.constant 0 : i32
    return %arg0, %c0_i32, %arg1 : i32, i32, i32
  }
  func.func @transform_1(%arg0: i32, %arg1: i32) -> (i32, i32, i32) {
    %c0_i32 = arith.constant 0 : i32
    %c0_i32_0 = arith.constant 0 : i32
    return %arg0, %c0_i32, %arg1 : i32, i32, i32
  }
  func.func @transform_2(%arg0: i32, %arg1: i32) -> (i32, i32, i32) {
    %c0_i32 = arith.constant 0 : i32
    %c0_i32_0 = arith.constant 0 : i32
    return %arg0, %c0_i32, %arg1 : i32, i32, i32
  }
}

</mosaic_0001>

<llo_original>
// kernel: tpu_custom_call.1
$region0: #{tpu_custom_call.1}
  #allocation0 [shape = 'u32[]', space=smem, size = 0x4, offset = 0x4, fixed_abs, tag = 'smem constant byte address 0x4 - core index']
  #allocation1 [shape = 'u32[72,128]{1,0:T(1,128)}', space=vmem, size = 0x9000, scoped, tag = 'internal scratch']
  %s0 = inlined_call_operand.hbm [shape: f32[2,16,20], index: 0, kind: input, shape index: {}]
  %s1 = inlined_call_operand.hbm [shape: f32[2,16,20], index: 1, kind: input, shape index: {}]
  %s2 = inlined_call_operand.vmem [shape: f32[2,32,20], index: 2, kind: output, shape index: {}]
  %s3 = sld [smem:[#allocation0]]
  $region49: #{tpu_custom_call.1} parent=0
    _
  %s5 = ssub.s32 1, %s3
  %s6 = scalar_select 0, %s5, %s3
  $region1: #{tpu_custom_call.1} parent=0
    #allocation2 [shape = 'u8[16384]{0}', space=vmem, size = 0x4000, scoped, tag = 'input window, operand 0']
    #allocation3 [shape = 's32[2]{0}', space=sflag, size = 0x8, scoped, tag = 'scoped memory for tpu_custom_call.1']
    #allocation4 [shape = 'u8[16384]{0}', space=vmem, size = 0x4000, scoped, tag = 'input window, operand 1']
    #allocation5 [shape = 's32[2]{0}', space=sflag, size = 0x8, scoped, tag = 'scoped memory for tpu_custom_call.1']
    %7 = vsyncpa [#allocation3], 0
    %s8 = scalar_lea.sflag [#allocation3], 1
    %9 = vsyncpa %s8, 0
    %10 = vsyncpa [#allocation5], 0
    %s11 = scalar_lea.sflag [#allocation5], 1
    %12 = vsyncpa %s11, 0
    loop: start=0, step=1, limit=4
    $region2: #{tpu_custom_call.1} parent=1 // loop_pre_header
      _
    $region3: #{tpu_custom_call.1} parent=1 // loop_header
      %s14 = sphi 0, %s18
      %p15 = scmp.ge.s32.totalorder %s14, 4
      %s21 = sphi 0, %s33
      %s22 = sphi 0, %s29
      %s23 = sphi 0, %s21
      %s24 = sphi 0, %s22
      %s25 = sphi 0, %s23
      %s26 = sphi 0, %s24
      %s38 = sphi 0, %s40
      %s41 = sphi 0, %s38
      %s42 = sphi 0, %s41
      %s58 = sphi 0, %s42
      %s66 = sphi 0, %s68
      %s69 = sphi 0, %s66
      %s70 = sphi 0, %s69
      %s86 = sphi 0, %s70
      %s94 = sphi 0, %s96
      %s97 = sphi 0, %s94
      %s98 = sphi 0, %s97
      %s114 = sphi 0, %s98
    $region4: #{tpu_custom_call.1} parent=1 // loop_header_branch
      %17 = sbr.rel (%p15) target = $region8
    $region5: #{tpu_custom_call.1} parent=1 // loop_body
      %s19 = ssub.s32 %s14, 1
      %s20 = ssub.s32 %s14, 2
      %s27 = sadd.s32 1, %s22
      %p28 = scmp.ge.s32.totalorder %s27, 1
      %s29 = scalar_select %p28, 0, %s27
      %s30 = sadd.s32 1, %s21
      %s31 = scalar_select %p28, %s30, %s21
      %p32 = scmp.ge.s32.totalorder %s31, 2
      %s33 = scalar_select %p32, 0, %s31
      %s34 = ssub.s32 %s21, %s33
      %s35 = ssub.s32 %s22, %s29
      %s36 = sor.u32 %s34, %s35
      %p37 = scmp.eq.s32.totalorder %s36, 0
      %s39 = sadd.s32 %s38, 1
      %s40 = scalar_select %p37, %s38, %s39
      %p43 = pneg %p37
      %p44 = scmp.eq.s32.totalorder %s14, 1
      %p45 = por %p43, %p44
      %p46 = scmp.ne.s32.totalorder %s38, %s41
      %p47 = scmp.eq.s32.totalorder %s14, 0
      %p48 = por %p46, %p47
      %p49 = scmp.ne.s32.totalorder %s38, %s41
      %p50 = scmp.eq.s32.totalorder %s19, 1
      %p51 = por %p49, %p50
      %p52 = scmp.ne.s32.totalorder %s41, %s42
      %p53 = scmp.eq.s32.totalorder %s19, 0
      %p54 = por %p52, %p53
      %p55 = scmp.ne.s32.totalorder %s41, %s42
      %p56 = scmp.eq.s32.totalorder %s20, 1
      %p57 = por %p55, %p56
      %p59 = scmp.ne.s32.totalorder %s42, %s58
      %p60 = scmp.eq.s32.totalorder %s20, 0
      %p61 = por %p59, %p60
      %s62 = ssub.s32 %s21, %s33
      %s63 = ssub.s32 %s22, %s29
      %s64 = sor.u32 %s62, %s63
      %p65 = scmp.eq.s32.totalorder %s64, 0
      %s67 = sadd.s32 %s66, 1
      %s68 = scalar_select %p65, %s66, %s67
      %p71 = pneg %p65
      %p72 = scmp.eq.s32.totalorder %s14, 1
      %p73 = por %p71, %p72
      %p74 = scmp.ne.s32.totalorder %s66, %s69
      %p75 = scmp.eq.s32.totalorder %s14, 0
      %p76 = por %p74, %p75
      %p77 = scmp.ne.s32.totalorder %s66, %s69
      %p78 = scmp.eq.s32.totalorder %s19, 1
      %p79 = por %p77, %p78
      %p80 = scmp.ne.s32.totalorder %s69, %s70
      %p81 = scmp.eq.s32.totalorder %s19, 0
      %p82 = por %p80, %p81
      %p83 = scmp.ne.s32.totalorder %s69, %s70
      %p84 = scmp.eq.s32.totalorder %s20, 1
      %p85 = por %p83, %p84
      %p87 = scmp.ne.s32.totalorder %s70, %s86
      %p88 = scmp.eq.s32.totalorder %s20, 0
      %p89 = por %p87, %p88
      %s90 = ssub.s32 %s21, %s33
      %s91 = ssub.s32 %s22, %s29
      %s92 = sor.u32 %s90, %s91
      %p93 = scmp.eq.s32.totalorder %s92, 0
      %s95 = sadd.s32 %s94, 1
      %s96 = scalar_select %p93, %s94, %s95
      %p99 = pneg %p93
      %p100 = scmp.eq.s32.totalorder %s14, 1
      %p101 = por %p99, %p100
      %p102 = scmp.ne.s32.totalorder %s94, %s97
      %p103 = scmp.eq.s32.totalorder %s14, 0
      %p104 = por %p102, %p103
      %p105 = scmp.ne.s32.totalorder %s94, %s97
      %p106 = scmp.eq.s32.totalorder %s19, 1
      %p107 = por %p105, %p106
      %p108 = scmp.ne.s32.totalorder %s97, %s98
      %p109 = scmp.eq.s32.totalorder %s19, 0
      %p110 = por %p108, %p109
      %p111 = scmp.ne.s32.totalorder %s97, %s98
      %p112 = scmp.eq.s32.totalorder %s20, 1
      %p113 = por %p111, %p112
      %p115 = scmp.ne.s32.totalorder %s98, %s114
      %p116 = scmp.eq.s32.totalorder %s20, 0
      %p117 = por %p115, %p116
      %p118 = scmp.le.s32.totalorder 1, %s14
      %p119 = scmp.lt.s32.totalorder %s14, 3
      %p120 = pnand %p118, %p119
      %p121 = pneg %p120
      // Predicated region
      $region9: #{tpu_custom_call.1} parent=5 // pred_check
        _
      $region10: #{tpu_custom_call.1} parent=5 // pred_check_branch
        %123 = sbr.rel (%p120) target = $region12
      $region11: #{tpu_custom_call.1} parent=5 // pred_region
        %s124 = ssub.s32 %s14, 1
      $region12: #{tpu_custom_call.1} parent=5 // pred_fallthru
        _
      %p125 = scmp.lt.s32.totalorder %s14, 2
      // Predicated region
      $region13: #{tpu_custom_call.1} parent=5 // pred_check
        %p126 = pneg %p125
      $region14: #{tpu_custom_call.1} parent=5 // pred_check_branch
        %128 = sbr.rel (%p126) target = $region16
      $region15: #{tpu_custom_call.1} parent=5 // pred_region
        // Predicated region
        $region17: #{tpu_custom_call.1} parent=15 // pred_check
          %p129 = pneg %p48
        $region18: #{tpu_custom_call.1} parent=15 // pred_check_branch
          %131 = sbr.rel (%p129) target = $region20
        $region19: #{tpu_custom_call.1} parent=15 // pred_region
          %s132 = sand.u32 %s38, 1
          %s133 = scalar_lea.sflag [#allocation3], %s132
          %s134 = sand.u32 %s38, 1
          %s135 = smul.addr %s134, 16
          %s136 = scalar_lea.vmem [#allocation2], %s135
          %138 = vsyncadd %s133, 0
          %s139 = smul.addr %s21, 2
          %s140 = sadd.s32 %s22, %s139
          %s141 = smul.addr %s140, 8
          %s142 = scalar_lea.hbm %s0, %s141
          %s143 = sshll.u32 %s142, 4
          %s144 = int_to_ptr.hbm [resolvable:$true] %s143
          %s145 = sshll.u32 %s136, 4
          %s146 = int_to_ptr.vmem [resolvable:$true] %s145
          %151 = dma.hbm_to_vmem [thread:$0]  %s144, 256, %s146, %s133, 128, 128, 8
        $region20: #{tpu_custom_call.1} parent=15 // pred_fallthru
          _
        // Predicated region
        $region21: #{tpu_custom_call.1} parent=15 // pred_check
          %p152 = pneg %p76
        $region22: #{tpu_custom_call.1} parent=15 // pred_check_branch
          %154 = sbr.rel (%p152) target = $region24
        $region23: #{tpu_custom_call.1} parent=15 // pred_region
          %s155 = sand.u32 %s66, 1
          %s156 = scalar_lea.sflag [#allocation5], %s155
          %s157 = sand.u32 %s66, 1
          %s158 = smul.addr %s157, 16
          %s159 = scalar_lea.vmem [#allocation4], %s158
          %161 = vsyncadd %s156, 0
          %s162 = smul.addr %s21, 2
          %s163 = sadd.s32 %s22, %s162
          %s164 = smul.addr %s163, 8
          %s165 = scalar_lea.hbm %s1, %s164
          %s166 = sshll.u32 %s165, 4
          %s167 = int_to_ptr.hbm [resolvable:$true] %s166
          %s168 = sshll.u32 %s159, 4
          %s169 = int_to_ptr.vmem [resolvable:$true] %s168
          %174 = dma.hbm_to_vmem [thread:$0]  %s167, 256, %s169, %s156, 128, 128, 8
        $region24: #{tpu_custom_call.1} parent=15 // pred_fallthru
          _
      $region16: #{tpu_custom_call.1} parent=5 // pred_fallthru
        _
      %p175 = scmp.le.s32.totalorder 1, %s14
      %p176 = scmp.lt.s32.totalorder %s14, 3
      %p177 = pnand %p175, %p176
      %p178 = pneg %p177
      // Predicated region
      $region25: #{tpu_custom_call.1} parent=5 // pred_check
        _
      $region26: #{tpu_custom_call.1} parent=5 // pred_check_branch
        %180 = sbr.rel (%p177) target = $region28
      $region27: #{tpu_custom_call.1} parent=5 // pred_region
        %s181 = ssub.s32 %s14, 1
        %s182 = sand.u32 %s41, 1
        %s183 = scalar_lea.sflag [#allocation3], %s182
        %s184 = sand.u32 %s41, 1
        %s185 = smul.addr %s184, 16
        %s186 = scalar_lea.vmem [#allocation2], %s185
        // Predicated region
        $region29: #{tpu_custom_call.1} parent=27 // pred_check
          %p187 = pneg %p54
        $region30: #{tpu_custom_call.1} parent=27 // pred_check_branch
          %189 = sbr.rel (%p187) target = $region32
        $region31: #{tpu_custom_call.1} parent=27 // pred_region
          %191 = dma.done %s183, 256
        $region32: #{tpu_custom_call.1} parent=27 // pred_fallthru
          _
        %s192 = sand.u32 %s69, 1
        %s193 = scalar_lea.sflag [#allocation5], %s192
        %s194 = sand.u32 %s69, 1
        %s195 = smul.addr %s194, 16
        %s196 = scalar_lea.vmem [#allocation4], %s195
        // Predicated region
        $region33: #{tpu_custom_call.1} parent=27 // pred_check
          %p197 = pneg %p82
        $region34: #{tpu_custom_call.1} parent=27 // pred_check_branch
          %199 = sbr.rel (%p197) target = $region36
        $region35: #{tpu_custom_call.1} parent=27 // pred_region
          %201 = dma.done %s193, 256
        $region36: #{tpu_custom_call.1} parent=27 // pred_fallthru
          _
        %s202 = sand.u32 %s41, 1
        %s203 = scalar_lea.sflag [#allocation3], %s202
        %s204 = sand.u32 %s41, 1
        %s205 = smul.addr %s204, 16
        %s206 = scalar_lea.vmem [#allocation2], %s205
        %p207 = pneg %p54
        %p208 = pneg %p51
        %s209 = sand.u32 %s69, 1
        %s210 = scalar_lea.sflag [#allocation5], %s209
        %s211 = sand.u32 %s69, 1
        %s212 = smul.addr %s211, 16
        %s213 = scalar_lea.vmem [#allocation4], %s212
        %p214 = pneg %p82
        %p215 = pneg %p79
        %p216 = pneg %p110
        %p217 = pneg %p107
        %p218 = scmp.lt.s32.totalorder %s23, 1
        %s219 = scalar_select %p218, %s23, 1
        %p220 = scmp.lt.s32.totalorder %s24, 0
        %s221 = scalar_select %p220, %s24, 0
        %s222 = smul.addr %s219, 4
        %s223 = sadd.s32 %s221, %s222
        %s224 = smul.addr %s223, 8
        %s225 = scalar_lea.vmem %s2, %s224
        %p226 = scmp.lt.s32.totalorder %s23, 1
        %s227 = scalar_select %p226, %s23, 1
        %p228 = scmp.lt.s32.totalorder %s24, 0
        %s229 = scalar_select %p228, %s24, 0
        %s230 = smul.addr %s227, 4
        %s231 = sadd.s32 %s229, %s230
        %s232 = smul.addr %s231, 8
        %s233 = scalar_lea.vmem %s2, %s232
        %v234 = vld [vmem:[%s186] sm:$0xff]
        %v235 = vld [vmem:[%s186 + $0x8] sm:$0xff]
        %vm236 = vcmask 162816
        %237 = vst.msk [vmem:[%s233] sm:$0xff] %vm236, %v234
        %238 = vst.msk [vmem:[%s233 + $0x8] sm:$0xff] %vm236, %v235
        %v239 = vld [vmem:[%s196] sm:$0xff]
        %v240 = vld [vmem:[%s196 + $0x8] sm:$0xff]
        %241 = vst.msk [vmem:[%s233 + $0x10] sm:$0xff] %vm236, %v239
        %242 = vst.msk [vmem:[%s233 + $0x18] sm:$0xff] %vm236, %v240
        %p243 = scmp.lt.s32.totalorder %s23, 1
        %s244 = scalar_select %p243, %s23, 1
        %p245 = scmp.lt.s32.totalorder %s24, 0
        %s246 = scalar_select %p245, %s24, 0
        %s247 = smul.addr %s244, 4
        %s248 = sadd.s32 %s246, %s247
        %s249 = smul.addr %s248, 8
        %s250 = scalar_lea.vmem %s2, %s249
        // Predicated region
        $region37: #{tpu_custom_call.1} parent=27 // pred_check
          %p251 = pneg %p107
        $region38: #{tpu_custom_call.1} parent=27 // pred_check_branch
          %253 = sbr.rel (%p251) target = $region40
        $region39: #{tpu_custom_call.1} parent=27 // pred_region
          _
        $region40: #{tpu_custom_call.1} parent=27 // pred_fallthru
          _
      $region28: #{tpu_custom_call.1} parent=5 // pred_fallthru
        _
      %p254 = scmp.le.s32.totalorder 2, %s14
      // Predicated region
      $region41: #{tpu_custom_call.1} parent=5 // pred_check
        %p255 = pneg %p254
      $region42: #{tpu_custom_call.1} parent=5 // pred_check_branch
        %257 = sbr.rel (%p255) target = $region44
      $region43: #{tpu_custom_call.1} parent=5 // pred_region
        %s258 = ssub.s32 %s14, 2
        // Predicated region
        $region45: #{tpu_custom_call.1} parent=43 // pred_check
          %p259 = pneg %p113
        $region46: #{tpu_custom_call.1} parent=43 // pred_check_branch
          %261 = sbr.rel (%p259) target = $region48
        $region47: #{tpu_custom_call.1} parent=43 // pred_region
          %p262 = scmp.lt.s32.totalorder %s25, 1
          %s263 = scalar_select %p262, %s25, 1
          %p264 = scmp.lt.s32.totalorder %s26, 0
          %s265 = scalar_select %p264, %s26, 0
          %s266 = smul.addr %s263, 4
          %s267 = sadd.s32 %s265, %s266
          %s268 = smul.addr %s267, 8
          %s269 = scalar_lea.vmem %s2, %s268
        $region48: #{tpu_custom_call.1} parent=43 // pred_fallthru
          _
      $region44: #{tpu_custom_call.1} parent=5 // pred_fallthru
        _
    $region6: #{tpu_custom_call.1} parent=1 // loop_footer
      %s18 = sadd.s32 1, %s14
    $region7: #{tpu_custom_call.1} parent=1 // loop_footer_branch
      %13 = sbr.rel target = $region3
    $region8: #{tpu_custom_call.1} parent=1 // loop_exit
      _
    %270 = vsyncpa [#allocation3], 1
    %s271 = scalar_lea.sflag [#allocation3], 1
    %272 = vsyncpa %s271, 1
    %273 = vsyncpa [#allocation5], 1
    %s274 = scalar_lea.sflag [#allocation5], 1
    %275 = vsyncpa %s274, 1

</llo_original>
